<compile_context>
chip_gen: v6e
topology: v6e:2x2x1
jax: 0.10.0
libtpu: 0.0.40
codegen_flags: <defaults>
</compile_context>

<pallas_src>
import functools
import math

import jax
import jax.numpy as jnp
from jax.experimental import pallas as pl
from jax.experimental.pallas import tpu as pltpu


def _round_up(x, m):
    return (x + m - 1) // m * m


# ---------------------------------------------------------------------------
# Kernel
# ---------------------------------------------------------------------------
def _sae_kernel(x_ref, we_ref, be_ref, wd_ref, bd_ref, *refs,
                tm, th, n_valid, need_mask, store_outputs):
    """Grid is (token tiles [parallel], dictionary chunks [arbitrary]).

    Inputs (VMEM tiles):
      x_ref  : (tm, D)   representation tile, f32, resident across the h axis
      we_ref : (D, th)   encoder weight chunk (compute dtype)
      be_ref : (nh, th)  encoder bias, fully resident (f32)
      wd_ref : (th, D)   decoder weight chunk (compute dtype)
      bd_ref : (1, D)    decoder bias, resident (f32)
    Outputs (only when store_outputs):
      enc_ref  : (tm, th)     encoded (post-ReLU) activations chunk
      rec_ref  : (tm, D)      reconstruction (written at h == last)
    Output (always):
      sums_ref : (1, 8, 128)  per-token-tile partials [sq_err, l1, l0] in
                              lanes 0/1/2 of sublane 0 (written at h == last)
    Scratch:
      acc_ref : (tm, D) f32   reconstruction accumulator over h
      l1_ref  : (1, th) f32   per-lane sum|enc| partials
      l0_ref  : (1, th) f32   per-lane nonzero-count partials
    """
    if store_outputs:
        enc_ref, rec_ref, sums_ref, acc_ref, l1_ref, l0_ref = refs
    else:
        enc_ref = rec_ref = None
        sums_ref, acc_ref, l1_ref, l0_ref = refs

    i = pl.program_id(0)          # token-tile index   ("parallel")
    h = pl.program_id(1)          # dictionary chunk   ("arbitrary", innermost)
    nh = pl.num_programs(1)

    @pl.when(h == 0)
    def _():
        acc_ref[...] = jnp.zeros_like(acc_ref)
        l1_ref[...] = jnp.zeros_like(l1_ref)
        l0_ref[...] = jnp.zeros_like(l0_ref)

    x_f32 = x_ref[...].astype(jnp.float32)     # exact f32 view for the MSE diff
    x_cd = x_ref[...].astype(we_ref.dtype)     # MXU operand dtype (bf16/f32)

    # Validity mask for padded token rows (only materialized when needed).
    if need_mask:
        row = i * tm + jax.lax.broadcasted_iota(jnp.int32, (tm, 1), 0)
        valid = (row < n_valid).astype(jnp.float32)
    else:
        valid = None

    # Resident b_enc: slice the current chunk instead of a per-step DMA.
    be = be_ref[pl.ds(h, 1), :].astype(jnp.float32)           # (1, th)

    # ---- encoder chunk: ReLU(x @ W_enc[:, h*th:...] + b_enc[...]) --------
    z = jnp.dot(x_cd, we_ref[...], preferred_element_type=jnp.float32) + be
    a = jnp.maximum(z, 0.0)                                    # f32 (tm, th)
    if need_mask:
        a = a * valid

    # Single narrow cast, reused for the enc store and the decoder matmul.
    a_dec = a.astype(wd_ref.dtype)
    if store_outputs:
        enc_ref[...] = (a_dec if enc_ref.dtype == wd_ref.dtype
                        else a.astype(enc_ref.dtype))

    # ---- decoder partial: accumulate a @ W_dec[h*th:..., :] --------------
    acc_ref[...] += jnp.dot(a_dec, wd_ref[...],
                            preferred_element_type=jnp.float32)

    # ---- stat partials: per-lane only, no scalar extraction per step -----
    # (a >= 0, so |a| == a)
    l1_ref[...] += jnp.sum(a, axis=0, keepdims=True)
    l0_ref[...] += jnp.sum((a > 0.0).astype(jnp.float32), axis=0, keepdims=True)

    # ---- finalize this token tile at the last dictionary chunk -----------
    @pl.when(h == nh - 1)
    def _():
        r = acc_ref[...] + bd_ref[...].astype(jnp.float32)
        if store_outputs:
            rec_ref[...] = r.astype(rec_ref.dtype)
        diff = x_f32 - r
        if need_mask:
            diff = diff * valid
        sq = jnp.sum(diff * diff)
        l1 = jnp.sum(l1_ref[...])
        l0 = jnp.sum(l0_ref[...])

        sub = jax.lax.broadcasted_iota(jnp.int32, (1, 8, 128), 1)
        lane = jax.lax.broadcasted_iota(jnp.int32, (1, 8, 128), 2)
        first = sub == 0
        sums_ref[...] = (jnp.where(first & (lane == 0), sq, 0.0)
                         + jnp.where(first & (lane == 1), l1, 0.0)
                         + jnp.where(first & (lane == 2), l0, 0.0))


# ---------------------------------------------------------------------------
# Tile / VMEM sizing heuristics
# ---------------------------------------------------------------------------
def _device_vmem_defaults():
    """(vmem_limit_bytes, working-set budget) per device kind."""
    try:
        kind = jax.devices()[0].device_kind.lower()
    except Exception:
        kind = ""
    if any(t in kind for t in ("v4", "v5", "v6")):
        # 128 MiB physical VMEM parts (v4 / v5e / v5p / v6e).
        return 100 * 1024 * 1024, 88 * 1024 * 1024
    # v7x (64 MiB per TensorCore) and unknown devices: stay conservative.
    return 48 * 1024 * 1024, 40 * 1024 * 1024


def _auto_tiles(N, D, H, cd_bytes, od_bytes, store_outputs, budget):
    """Pick (tm, th) against a VMEM working-set budget."""
    min_m = 16 if (store_outputs and od_bytes == 2) else 8
    n_cap = _round_up(max(N, 1), min_m)          # don't over-pad tiny inputs

    def working_set(tm, th):
        w = 2 * tm * D * 4                        # x tile (f32, 2 buffers)
        w += 2 * 2 * D * th * cd_bytes            # W_enc + W_dec chunks (2 bufs)
        w += 2 * (H + D) * 4                      # biases (resident, tiny)
        if store_outputs:
            w += 2 * tm * th * od_bytes           # encoded tile
            w += 2 * tm * D * od_bytes            # reconstruction tile
        w += tm * D * 4                           # recon accumulator scratch
        w += 4 * th * 4                           # l1 / l0 partial scratch
        w += tm * th * (4 + cd_bytes) + tm * D * 4  # live intermediates
        return w

    tm_list = [t for t in (1024, 512, 256, 128, 64, 32, 16, 8) if t >= min_m]
    th_list = [H] + [c for c in (4096, 2048, 1024, 512, 256, 128)
                     if c < H and H % c == 0]

    # Preferred: W_enc/W_dec fully resident (DMA'd once) with a token tile big
    # enough to keep the MXU fed.
    for tm in tm_list:
        tm_e = min(tm, n_cap)
        if tm_e >= min(256, n_cap) and working_set(tm_e, H) <= budget:
            return tm_e, H
    # Otherwise stream the dictionary axis: maximize tm first (arithmetic
    # intensity of the weight stream), then th (grid-step count, DMA size).
    for tm in tm_list:
        tm_e = min(tm, n_cap)
        for th in th_list:
            if working_set(tm_e, th) <= budget:
                return tm_e, th
    return min_m, th_list[-1]


# ---------------------------------------------------------------------------
# Wrappers
# ---------------------------------------------------------------------------
@functools.partial(
    jax.jit,
    static_argnames=("tm", "th", "compute_dtype", "out_dtype",
                     "return_activations", "vmem_limit_bytes"))
def _sae_forward(rep, w_enc, b_enc, w_dec, b_dec, *, tm, th, compute_dtype,
                 out_dtype, return_activations, vmem_limit_bytes):
    B, S, D = rep.shape
    H = w_enc.shape[1]
    N = B * S

    assert H % th == 0, "th must divide the dictionary size H"
    nh = H // th
    N_pad = _round_up(N, tm)
    nt = N_pad // tm
    need_mask = N_pad != N

    # x stays in its input dtype (typically f32): no wrapper-side HBM cast
    # pass; the MXU-operand cast happens per tile inside the kernel and the
    # MSE diff uses the exact f32 view.
    x = rep.reshape(N, D)
    if need_mask:
        x = jnp.pad(x, ((0, N_pad - N), (0, 0)))

    # Weights should already be stored in compute_dtype (then these are
    # no-ops); otherwise this is a one-time cast pass.
    w_enc = w_enc.astype(compute_dtype)
    w_dec = w_dec.astype(compute_dtype)
    be2 = b_enc.reshape(nh, th).astype(jnp.float32)   # resident, sliced per h
    bd2 = b_dec.reshape(1, D).astype(jnp.float32)

    kernel = functools.partial(_sae_kernel, tm=tm, th=th, n_valid=N,
                               need_mask=need_mask,
                               store_outputs=return_activations)

    out_shape = []
    out_specs = []
    if return_activations:
        out_shape += [jax.ShapeDtypeStruct((N_pad, H), out_dtype),
                      jax.ShapeDtypeStruct((N_pad, D), out_dtype)]
        out_specs += [pl.BlockSpec((tm, th), lambda i, h: (i, h)),   # encoded
                      pl.BlockSpec((tm, D), lambda i, h: (i, 0))]    # recon
    out_shape += [jax.ShapeDtypeStruct((nt, 8, 128), jnp.float32)]
    out_specs += [pl.BlockSpec((1, 8, 128), lambda i, h: (i, 0, 0))]  # sums

    results = pl.pallas_call(
        kernel,
        out_shape=tuple(out_shape),
        grid_spec=pltpu.PrefetchScalarGridSpec(
            num_scalar_prefetch=0,
            grid=(nt, nh),
            in_specs=[
                # x tile: resident over the whole h loop.
                pl.BlockSpec((tm, D), lambda i, h: (i, 0)),
                # Weight chunks; with th == H these index maps are constant,
                # so the weights are DMA'd from HBM exactly once.
                pl.BlockSpec((D, th), lambda i, h: (0, h)),
                pl.BlockSpec((nh, th), lambda i, h: (0, 0)),   # b_enc resident
                pl.BlockSpec((th, D), lambda i, h: (h, 0)),
                pl.BlockSpec((1, D), lambda i, h: (0, 0)),     # b_dec resident
            ],
            out_specs=tuple(out_specs),
            scratch_shapes=[
                pltpu.VMEM((tm, D), jnp.float32),   # recon accumulator
                pltpu.VMEM((1, th), jnp.float32),   # per-lane |enc| partials
                pltpu.VMEM((1, th), jnp.float32),   # per-lane nonzero partials
            ],
        ),
        compiler_params=pltpu.CompilerParams(
            dimension_semantics=("parallel", "arbitrary"),
            vmem_limit_bytes=vmem_limit_bytes),
    )(x, w_enc, be2, w_dec, bd2)

    if return_activations:
        enc, rec, sums = results
    else:
        (sums,) = results
        enc = rec = None

    # Per-tile partials reduced in the wrapper (keeps the token axis parallel).
    sq_sum = jnp.sum(sums[:, 0, 0])
    l1_sum = jnp.sum(sums[:, 0, 1])
    l0_sum = jnp.sum(sums[:, 0, 2])

    mse_loss = sq_sum / jnp.float32(N * D)
    l1_loss = l1_sum / jnp.float32(N * H)
    l0_metric = l0_sum / jnp.float32(N * H)

    if return_activations:
        if need_mask:
            enc = enc[:N]
            rec = rec[:N]
        enc = enc.reshape(B, S, H)
        rec = rec.reshape(B, S, D)
    return mse_loss, l1_loss, l0_metric, enc, rec


def sae_on_clip_forward(rep, w_enc, b_enc, w_dec, b_dec, *,
                        tm=None, th=None,
                        compute_dtype=jnp.bfloat16,
                        out_dtype=None,
                        return_activations=True,
                        vmem_limit_bytes=None):
    """rep: [B, S, D] hooked CLIP representation.

    Weights are pre-transposed PyTorch Linear weights: w_enc [D, H],
    w_dec [H, D]; biases b_enc [H], b_dec [D].
    Returns (mse_loss, l1_loss, l0_metric, encoded [B,S,H] | None,
             recon [B,S,D] | None).
    """
    B, S, D = rep.shape
    H = w_enc.shape[1]
    N = B * S

    out_dtype = jnp.dtype(rep.dtype if out_dtype is None else out_dtype)
    compute_dtype = jnp.dtype(compute_dtype)

    default_limit, default_budget = _device_vmem_defaults()
    if vmem_limit_bytes is None:
        vmem_limit_bytes = default_limit
        budget = default_budget
    else:
        budget = int(vmem_limit_bytes * 0.85)

    auto_tm, auto_th = _auto_tiles(N, D, H, compute_dtype.itemsize,
                                   out_dtype.itemsize,
                                   bool(return_activations), budget)
    tm = auto_tm if tm is None else int(tm)
    th = auto_th if th is None else int(th)

    assert H % th == 0, "th must divide the dictionary size H"
    assert th == H or th % 128 == 0, \
        "partial dictionary tiles must be multiples of 128"

    return _sae_forward(rep, w_enc, b_enc, w_dec, b_dec,
                        tm=int(tm), th=int(th),
                        compute_dtype=compute_dtype, out_dtype=out_dtype,
                        return_activations=bool(return_activations),
                        vmem_limit_bytes=int(vmem_limit_bytes))


def reference_forward(rep, w_enc, b_enc, w_dec, b_dec):
    """Pure-JAX reference mirroring the PyTorch semantics (f32)."""
    enc = jax.nn.relu(rep @ w_enc + b_enc)
    rec = enc @ w_dec + b_dec
    mse = jnp.mean((rep - rec) ** 2)
    l1 = jnp.mean(jnp.abs(enc))
    l0 = jnp.count_nonzero(enc) / enc.size
    return mse, l1, l0, enc, rec


if __name__ == "__main__":
    # Small synthetic shapes consistent with the module:
    #   B=2 images, S=8 tokens, activation_dim D=32, expansion_factor=4 -> H=128.
    B, S, D, EXPANSION = 2, 8, 32, 4
    H = D * EXPANSION

    key = jax.random.PRNGKey(0)
    k_rep, k_we, k_be, k_wd, k_bd = jax.random.split(key, 5)

    # Hooked CLIP representation (stands in for the frozen backbone output).
    rep = jax.random.normal(k_rep, (B, S, D), dtype=jnp.float32)

    # Deterministic synthetic SAE parameters (nn.Linear-style uniform init),
    # stored pre-transposed: w_enc [D, H], w_dec [H, D].
    w_enc = jax.random.uniform(k_we, (D, H), jnp.float32,
                               -1.0 / math.sqrt(D), 1.0 / math.sqrt(D))
    b_enc = jax.random.uniform(k_be, (H,), jnp.float32,
                               -1.0 / math.sqrt(D), 1.0 / math.sqrt(D))
    w_dec = jax.random.uniform(k_wd, (H, D), jnp.float32,
                               -1.0 / math.sqrt(H), 1.0 / math.sqrt(H))
    # geom_dec_bias=True only re-inits the decoder bias with the same fan_in
    # bound, so this synthetic init covers both branches.
    b_dec = jax.random.uniform(k_bd, (D,), jnp.float32,
                               -1.0 / math.sqrt(H), 1.0 / math.sqrt(H))

    mse_r, l1_r, l0_r, enc_r, rec_r = reference_forward(
        rep, w_enc, b_enc, w_dec, b_dec)

    # --- exact-precision pass (f32 MXU operands) for tight correctness ----
    mse, l1, l0, enc, rec = sae_on_clip_forward(
        rep, w_enc, b_enc, w_dec, b_dec, compute_dtype=jnp.float32)
    jax.block_until_ready((mse, l1, l0, enc, rec))

    assert jnp.allclose(enc, enc_r, atol=1e-5, rtol=1e-5)
    assert jnp.allclose(rec, rec_r, atol=1e-5, rtol=1e-5)
    assert jnp.allclose(mse, mse_r, atol=1e-6, rtol=1e-5)
    assert jnp.allclose(l1, l1_r, atol=1e-6, rtol=1e-5)
    assert jnp.allclose(l0, l0_r, atol=1e-6, rtol=1e-5)

    # --- losses-only pass (what the PyTorch forward actually returns) -----
    mse_s, l1_s, l0_s, _, _ = sae_on_clip_forward(
        rep, w_enc, b_enc, w_dec, b_dec, compute_dtype=jnp.float32,
        return_activations=False)
    jax.block_until_ready((mse_s, l1_s, l0_s))
    assert jnp.allclose(mse_s, mse_r, atol=1e-6, rtol=1e-5)
    assert jnp.allclose(l1_s, l1_r, atol=1e-6, rtol=1e-5)
    assert jnp.allclose(l0_s, l0_r, atol=1e-6, rtol=1e-5)

    # --- performance-mode pass (bf16 MXU operands, f32 accumulate) --------
    # Weights pre-stored in the compute dtype so the wrapper cast is a no-op.
    w_enc_b = w_enc.astype(jnp.bfloat16)
    w_dec_b = w_dec.astype(jnp.bfloat16)
    mse_b, l1_b, l0_b, enc_b, rec_b = sae_on_clip_forward(
        rep, w_enc_b, b_enc, w_dec_b, b_dec,
        compute_dtype=jnp.bfloat16, out_dtype=jnp.bfloat16)
    jax.block_until_ready((mse_b, l1_b, l0_b, enc_b, rec_b))

    assert jnp.allclose(mse_b, mse_r, atol=5e-2, rtol=5e-2)
    assert jnp.allclose(l1_b, l1_r, atol=5e-2, rtol=5e-2)
    assert jnp.allclose(l0_b, l0_r, atol=5e-2, rtol=5e-2)

    print("KERNEL_OK")
</pallas_src>

<mosaic_0001>
module attributes {stable_mosaic.version = 11 : i64} {
  func.func @_sae_kernel(%arg0: i32, %arg1: i32, %arg2: memref<16x32xf32, #tpu.memory_space<vmem>>, %arg3: memref<32x128xf32, #tpu.memory_space<vmem>>, %arg4: memref<1x128xf32, #tpu.memory_space<vmem>>, %arg5: memref<128x32xf32, #tpu.memory_space<vmem>>, %arg6: memref<1x32xf32, #tpu.memory_space<vmem>>, %arg7: memref<16x128xf32, #tpu.memory_space<vmem>>, %arg8: memref<16x32xf32, #tpu.memory_space<vmem>>, %arg9: memref<1x8x128xf32, #tpu.memory_space<vmem>>, %arg10: memref<16x32xf32, #tpu.memory_space<vmem>>, %arg11: memref<1x128xf32, #tpu.memory_space<vmem>>, %arg12: memref<1x128xf32, #tpu.memory_space<vmem>>) attributes {dimension_semantics = [#tpu.dimension_semantics<parallel>, #tpu.dimension_semantics<arbitrary>], iteration_bounds = array<i64: 1, 1>, scalar_prefetch = 0 : i64, scratch_operands = 3 : i64, tpu.core_type = #tpu.core_type<tc>, window_params = [{transform_indices = @transform_0, window_bounds = array<i64: 16, 32>}, {transform_indices = @transform_1, window_bounds = array<i64: 32, 128>}, {pipeline_mode = #tpu.pipeline_mode<synchronous>, transform_indices = @transform_2, window_bounds = array<i64: 1, 128>}, {transform_indices = @transform_3, window_bounds = array<i64: 128, 32>}, {pipeline_mode = #tpu.pipeline_mode<synchronous>, transform_indices = @transform_4, window_bounds = array<i64: 1, 32>}, {transform_indices = @transform_5, window_bounds = array<i64: 16, 128>}, {transform_indices = @transform_6, window_bounds = array<i64: 16, 32>}, {transform_indices = @transform_7, window_bounds = array<i64: 1, 8, 128>}]} {
    %c0_i32 = arith.constant 0 : i32
    %0 = arith.cmpi eq, %arg1, %c0_i32 : i32
    %1 = arith.extui %0 : i1 to i32
    %c0_i32_0 = arith.constant 0 : i32
    %2 = arith.cmpi ne, %1, %c0_i32_0 : i32
    scf.if %2 {
      %cst_30 = arith.constant 0.000000e+00 : f32
      %36 = vector.broadcast %cst_30 : f32 to vector<16x32xf32>
      %c0_31 = arith.constant 0 : index
      %c0_32 = arith.constant 0 : index
      %37 = vector.load %arg10[%c0_31, %c0_32] : memref<16x32xf32, #tpu.memory_space<vmem>>, vector<16x32xf32>
      tpu.vector_store %arg10[%c0_31, %c0_32], %36 {strides = array<i32>} : memref<16x32xf32, #tpu.memory_space<vmem>>, vector<16x32xf32>,
      %cst_33 = arith.constant 0.000000e+00 : f32
      %38 = vector.broadcast %cst_33 : f32 to vector<1x128xf32>
      %c0_34 = arith.constant 0 : index
      %c0_35 = arith.constant 0 : index
      %39 = vector.load %arg11[%c0_34, %c0_35] : memref<1x128xf32, #tpu.memory_space<vmem>>, vector<1x128xf32>
      tpu.vector_store %arg11[%c0_34, %c0_35], %38 {strides = array<i32>} : memref<1x128xf32, #tpu.memory_space<vmem>>, vector<1x128xf32>,
      %cst_36 = arith.constant 0.000000e+00 : f32
      %40 = vector.broadcast %cst_36 : f32 to vector<1x128xf32>
      %c0_37 = arith.constant 0 : index
      %c0_38 = arith.constant 0 : index
      %41 = vector.load %arg12[%c0_37, %c0_38] : memref<1x128xf32, #tpu.memory_space<vmem>>, vector<1x128xf32>
      tpu.vector_store %arg12[%c0_37, %c0_38], %40 {strides = array<i32>} : memref<1x128xf32, #tpu.memory_space<vmem>>, vector<1x128xf32>,
    } else {
    }
    %c0 = arith.constant 0 : index
    %c0_1 = arith.constant 0 : index
    %3 = vector.load %arg2[%c0, %c0_1] : memref<16x32xf32, #tpu.memory_space<vmem>>, vector<16x32xf32>
    %c0_2 = arith.constant 0 : index
    %c0_3 = arith.constant 0 : index
    %4 = vector.load %arg2[%c0_2, %c0_3] : memref<16x32xf32, #tpu.memory_space<vmem>>, vector<16x32xf32>
    %5 = arith.index_cast %arg1 : i32 to index
    %c0_4 = arith.constant 0 : index
    %6 = vector.load %arg4[%5, %c0_4] : memref<1x128xf32, #tpu.memory_space<vmem>>, vector<1x128xf32>
    %c0_5 = arith.constant 0 : index
    %c0_6 = arith.constant 0 : index
    %7 = vector.load %arg3[%c0_5, %c0_6] : memref<32x128xf32, #tpu.memory_space<vmem>>, vector<32x128xf32>
    %cst = arith.constant dense<0.000000e+00> : vector<16x128xf32>
    %8 = tpu.matmul %4, %7, %cst {dimension_numbers = #tpu.dot_dimension_numbers<[1], [0], [0], [1], [0, 0, 1, 1], [], []>} : vector<16x32xf32>, vector<32x128xf32>, vector<16x128xf32> -> vector<16x128xf32>
    %9 = vector.broadcast %6 : vector<1x128xf32> to vector<16x128xf32>
    %10 = arith.addf %8, %9 : vector<16x128xf32>
    %cst_7 = arith.constant 0.000000e+00 : f32
    %11 = vector.broadcast %cst_7 : f32 to vector<16x128xf32>
    %12 = arith.maximumf %10, %11 : vector<16x128xf32>
    %c0_8 = arith.constant 0 : index
    %c0_9 = arith.constant 0 : index
    %13 = vector.load %arg7[%c0_8, %c0_9] : memref<16x128xf32, #tpu.memory_space<vmem>>, vector<16x128xf32>
    tpu.vector_store %arg7[%c0_8, %c0_9], %12 {strides = array<i32>} : memref<16x128xf32, #tpu.memory_space<vmem>>, vector<16x128xf32>,
    %c0_10 = arith.constant 0 : index
    %c0_11 = arith.constant 0 : index
    %14 = vector.load %arg10[%c0_10, %c0_11] : memref<16x32xf32, #tpu.memory_space<vmem>>, vector<16x32xf32>
    %c0_12 = arith.constant 0 : index
    %c0_13 = arith.constant 0 : index
    %15 = vector.load %arg5[%c0_12, %c0_13] : memref<128x32xf32, #tpu.memory_space<vmem>>, vector<128x32xf32>
    %cst_14 = arith.constant dense<0.000000e+00> : vector<16x32xf32>
    %16 = tpu.matmul %12, %15, %cst_14 {dimension_numbers = #tpu.dot_dimension_numbers<[1], [0], [0], [1], [0, 0, 1, 1], [], []>} : vector<16x128xf32>, vector<128x32xf32>, vector<16x32xf32> -> vector<16x32xf32>
    %17 = arith.addf %14, %16 : vector<16x32xf32>
    %c0_15 = arith.constant 0 : index
    %c0_16 = arith.constant 0 : index
    %18 = vector.load %arg10[%c0_15, %c0_16] : memref<16x32xf32, #tpu.memory_space<vmem>>, vector<16x32xf32>
    tpu.vector_store %arg10[%c0_15, %c0_16], %17 {strides = array<i32>} : memref<16x32xf32, #tpu.memory_space<vmem>>, vector<16x32xf32>,
    %c0_17 = arith.constant 0 : index
    %c0_18 = arith.constant 0 : index
    %19 = vector.load %arg11[%c0_17, %c0_18] : memref<1x128xf32, #tpu.memory_space<vmem>>, vector<1x128xf32>
    %cst_19 = arith.constant dense<0.000000e+00> : vector<128xf32>
    %20 = vector.multi_reduction <add>, %12, %cst_19 [0] : vector<16x128xf32> to vector<128xf32>
    %21 = vector.shape_cast %20 : vector<128xf32> to vector<1x128xf32>
    %22 = arith.addf %19, %21 : vector<1x128xf32>
    %c0_20 = arith.constant 0 : index
    %c0_21 = arith.constant 0 : index
    %23 = vector.load %arg11[%c0_20, %c0_21] : memref<1x128xf32, #tpu.memory_space<vmem>>, vector<1x128xf32>
    tpu.vector_store %arg11[%c0_20, %c0_21], %22 {strides = array<i32>} : memref<1x128xf32, #tpu.memory_space<vmem>>, vector<1x128xf32>,
    %c0_22 = arith.constant 0 : index
    %c0_23 = arith.constant 0 : index
    %24 = vector.load %arg12[%c0_22, %c0_23] : memref<1x128xf32, #tpu.memory_space<vmem>>, vector<1x128xf32>
    %cst_24 = arith.constant 0.000000e+00 : f32
    %25 = vector.broadcast %cst_24 : f32 to vector<16x128xf32>
    %26 = arith.cmpf ogt, %12, %25 : vector<16x128xf32>
    %27 = arith.extui %26 : vector<16x128xi1> to vector<16x128xi32>
    %28 = arith.sitofp %27 : vector<16x128xi32> to vector<16x128xf32>
    %cst_25 = arith.constant dense<0.000000e+00> : vector<128xf32>
    %29 = vector.multi_reduction <add>, %28, %cst_25 [0] : vector<16x128xf32> to vector<128xf32>
    %30 = vector.shape_cast %29 : vector<128xf32> to vector<1x128xf32>
    %31 = arith.addf %24, %30 : vector<1x128xf32>
    %c0_26 = arith.constant 0 : index
    %c0_27 = arith.constant 0 : index
    %32 = vector.load %arg12[%c0_26, %c0_27] : memref<1x128xf32, #tpu.memory_space<vmem>>, vector<1x128xf32>
    tpu.vector_store %arg12[%c0_26, %c0_27], %31 {strides = array<i32>} : memref<1x128xf32, #tpu.memory_space<vmem>>, vector<1x128xf32>,
    %c0_i32_28 = arith.constant 0 : i32
    %33 = arith.cmpi eq, %arg1, %c0_i32_28 : i32
    %34 = arith.extui %33 : i1 to i32
    %c0_i32_29 = arith.constant 0 : i32
    %35 = arith.cmpi ne, %34, %c0_i32_29 : i32
    scf.if %35 {
      %c0_30 = arith.constant 0 : index
      %c0_31 = arith.constant 0 : index
      %36 = vector.load %arg10[%c0_30, %c0_31] : memref<16x32xf32, #tpu.memory_space<vmem>>, vector<16x32xf32>
      %c0_32 = arith.constant 0 : index
      %c0_33 = arith.constant 0 : index
      %37 = vector.load %arg6[%c0_32, %c0_33] : memref<1x32xf32, #tpu.memory_space<vmem>>, vector<1x32xf32>
      %38 = vector.broadcast %37 : vector<1x32xf32> to vector<16x32xf32>
      %39 = arith.addf %36, %38 : vector<16x32xf32>
      %c0_34 = arith.constant 0 : index
      %c0_35 = arith.constant 0 : index
      %40 = vector.load %arg8[%c0_34, %c0_35] : memref<16x32xf32, #tpu.memory_space<vmem>>, vector<16x32xf32>
      tpu.vector_store %arg8[%c0_34, %c0_35], %39 {strides = array<i32>} : memref<16x32xf32, #tpu.memory_space<vmem>>, vector<16x32xf32>,
      %41 = arith.subf %3, %39 : vector<16x32xf32>
      %42 = arith.mulf %41, %41 : vector<16x32xf32>
      %43 = vector.shape_cast %42 : vector<16x32xf32> to vector<1x16x32xf32>
      %cst_36 = arith.constant dense<0.000000e+00> : vector<1xf32>
      %44 = vector.multi_reduction <add>, %43, %cst_36 [1, 2] : vector<1x16x32xf32> to vector<1xf32>
      %45 = vector.shape_cast %44 : vector<1xf32> to vector<1x1x1xf32>
      %46 = vector.extract %45[0, 0, 0] : f32 from vector<1x1x1xf32>
      %c0_37 = arith.constant 0 : index
      %c0_38 = arith.constant 0 : index
      %47 = vector.load %arg11[%c0_37, %c0_38] : memref<1x128xf32, #tpu.memory_space<vmem>>, vector<1x128xf32>
      %48 = vector.shape_cast %47 : vector<1x128xf32> to vector<1x1x128xf32>
      %cst_39 = arith.constant dense<0.000000e+00> : vector<1xf32>
      %49 = vector.multi_reduction <add>, %48, %cst_39 [1, 2] : vector<1x1x128xf32> to vector<1xf32>
      %50 = vector.shape_cast %49 : vector<1xf32> to vector<1x1x1xf32>
      %51 = vector.extract %50[0, 0, 0] : f32 from vector<1x1x1xf32>
      %c0_40 = arith.constant 0 : index
      %c0_41 = arith.constant 0 : index
      %52 = vector.load %arg12[%c0_40, %c0_41] : memref<1x128xf32, #tpu.memory_space<vmem>>, vector<1x128xf32>
      %53 = vector.shape_cast %52 : vector<1x128xf32> to vector<1x1x128xf32>
      %cst_42 = arith.constant dense<0.000000e+00> : vector<1xf32>
      %54 = vector.multi_reduction <add>, %53, %cst_42 [1, 2] : vector<1x1x128xf32> to vector<1xf32>
      %55 = vector.shape_cast %54 : vector<1xf32> to vector<1x1x1xf32>
      %56 = vector.extract %55[0, 0, 0] : f32 from vector<1x1x1xf32>
      %57 = tpu.iota {dimensions = array<i32: 1>} : vector<1x8x128xi32>
      %58 = tpu.iota {dimensions = array<i32: 2>} : vector<1x8x128xi32>
      %c0_i32_43 = arith.constant 0 : i32
      %59 = vector.broadcast %c0_i32_43 : i32 to vector<1x8x128xi32>
      %60 = arith.cmpi eq, %57, %59 : vector<1x8x128xi32>
      %c0_i32_44 = arith.constant 0 : i32
      %61 = vector.broadcast %c0_i32_44 : i32 to vector<1x8x128xi32>
      %62 = arith.cmpi eq, %58, %61 : vector<1x8x128xi32>
      %63 = arith.andi %60, %62 : vector<1x8x128xi1>
      %cst_45 = arith.constant 0.000000e+00 : f32
      %64 = vector.broadcast %46 : f32 to vector<1x8x128xf32>
      %65 = vector.broadcast %cst_45 : f32 to vector<1x8x128xf32>
      %66 = arith.select %63, %64, %65 : vector<1x8x128xi1>, vector<1x8x128xf32>
      %c1_i32 = arith.constant 1 : i32
      %67 = vector.broadcast %c1_i32 : i32 to vector<1x8x128xi32>
      %68 = arith.cmpi eq, %58, %67 : vector<1x8x128xi32>
      %69 = arith.andi %60, %68 : vector<1x8x128xi1>
      %cst_46 = arith.constant 0.000000e+00 : f32
      %70 = vector.broadcast %51 : f32 to vector<1x8x128xf32>
      %71 = vector.broadcast %cst_46 : f32 to vector<1x8x128xf32>
      %72 = arith.select %69, %70, %71 : vector<1x8x128xi1>, vector<1x8x128xf32>
      %73 = arith.addf %66, %72 : vector<1x8x128xf32>
      %c2_i32 = arith.constant 2 : i32
      %74 = vector.broadcast %c2_i32 : i32 to vector<1x8x128xi32>
      %75 = arith.cmpi eq, %58, %74 : vector<1x8x128xi32>
      %76 = arith.andi %60, %75 : vector<1x8x128xi1>
      %cst_47 = arith.constant 0.000000e+00 : f32
      %77 = vector.broadcast %56 : f32 to vector<1x8x128xf32>
      %78 = vector.broadcast %cst_47 : f32 to vector<1x8x128xf32>
      %79 = arith.select %76, %77, %78 : vector<1x8x128xi1>, vector<1x8x128xf32>
      %80 = arith.addf %73, %79 : vector<1x8x128xf32>
      %c0_48 = arith.constant 0 : index
      %c0_49 = arith.constant 0 : index
      %c0_50 = arith.constant 0 : index
      %81 = vector.load %arg9[%c0_48, %c0_49, %c0_50] : memref<1x8x128xf32, #tpu.memory_space<vmem>>, vector<1x8x128xf32>
      tpu.vector_store %arg9[%c0_48, %c0_49, %c0_50], %80 {strides = array<i32>} : memref<1x8x128xf32, #tpu.memory_space<vmem>>, vector<1x8x128xf32>,
    } else {
    }
    return
  }
  func.func @transform_0(%arg0: i32, %arg1: i32) -> (i32, i32) {
    %c0_i32 = arith.constant 0 : i32
    %c0_i32_0 = arith.constant 0 : i32
    return %arg0, %c0_i32 : i32, i32
  }
  func.func @transform_1(%arg0: i32, %arg1: i32) -> (i32, i32) {
    %c0_i32 = arith.constant 0 : i32
    %c0_i32_0 = arith.constant 0 : i32
    return %c0_i32, %arg1 : i32, i32
  }
  func.func @transform_2(%arg0: i32, %arg1: i32) -> (i32, i32) {
    %c0_i32 = arith.constant 0 : i32
    %c0_i32_0 = arith.constant 0 : i32
    %c0_i32_1 = arith.constant 0 : i32
    return %c0_i32, %c0_i32_0 : i32, i32
  }
  func.func @transform_3(%arg0: i32, %arg1: i32) -> (i32, i32) {
    %c0_i32 = arith.constant 0 : i32
    %c0_i32_0 = arith.constant 0 : i32
    return %arg1, %c0_i32 : i32, i32
  }
  func.func @transform_4(%arg0: i32, %arg1: i32) -> (i32, i32) {
    %c0_i32 = arith.constant 0 : i32
    %c0_i32_0 = arith.constant 0 : i32
    %c0_i32_1 = arith.constant 0 : i32
    return %c0_i32, %c0_i32_0 : i32, i32
  }
  func.func @transform_5(%arg0: i32, %arg1: i32) -> (i32, i32) {
    %c0_i32 = arith.constant 0 : i32
    return %arg0, %arg1 : i32, i32
  }
  func.func @transform_6(%arg0: i32, %arg1: i32) -> (i32, i32) {
    %c0_i32 = arith.constant 0 : i32
    %c0_i32_0 = arith.constant 0 : i32
    return %arg0, %c0_i32 : i32, i32
  }
  func.func @transform_7(%arg0: i32, %arg1: i32) -> (i32, i32, i32) {
    %c0_i32 = arith.constant 0 : i32
    %c0_i32_0 = arith.constant 0 : i32
    %c0_i32_1 = arith.constant 0 : i32
    return %arg0, %c0_i32, %c0_i32_0 : i32, i32, i32
  }
}

</mosaic_0001>

<llo_original>
// kernel: _sae_forward.1
$region0: #{_sae_forward.1}
  #allocation0 [shape = 'u32[]', space=smem, size = 0x4, offset = 0x4, fixed_abs, tag = 'smem constant byte address 0x4 - core index']
  #allocation1 [shape = 'u32[144,128]{1,0:T(1,128)}', space=vmem, size = 0x12000, scoped, tag = 'internal scratch']
  #allocation2 [shape = 'f32[16,32]{1,0:T(8,128)}', space=vmem, size = 0x2000, scoped, tag = 'scratch operand']
  #allocation3 [shape = 'f32[1,128]{1,0:T(1,128)}', space=vmem, size = 0x200, scoped, tag = 'scratch operand']
  #allocation4 [shape = 'f32[1,128]{1,0:T(1,128)}', space=vmem, size = 0x200, scoped, tag = 'scratch operand']
  %s0 = inlined_call_operand.vmem [shape: f32[16,32], index: 0, kind: input, shape index: {}]
  %s1 = inlined_call_operand.vmem [shape: f32[32,128], index: 1, kind: input, shape index: {}]
  %s2 = inlined_call_operand.vmem [shape: f32[1,128], index: 2, kind: input, shape index: {}]
  %s3 = inlined_call_operand.vmem [shape: f32[128,32], index: 3, kind: input, shape index: {}]
  %s4 = inlined_call_operand.vmem [shape: f32[1,32], index: 4, kind: input, shape index: {}]
  %s5 = inlined_call_operand.hbm [shape: f32[16,128], index: 5, kind: output, shape index: {0}]
  %s6 = inlined_call_operand.hbm [shape: f32[16,32], index: 6, kind: output, shape index: {1}]
  %s7 = inlined_call_operand.vmem [shape: f32[1,8,128], index: 7, kind: output, shape index: {2}]
  %8 = xla_tuple %s5, %s6, %s7
  %s9 = sld [smem:[#allocation0]]
  $region54: #{_sae_forward.1} parent=0
    _
  %s11 = ssub.s32 1, %s9
  %s12 = scalar_select 0, %s11, %s9
  $region1: #{_sae_forward.1} parent=0
    #allocation5 [shape = 'u8[8192]{0}', space=vmem, size = 0x2000, scoped, tag = 'output window, operand 0, single buffered']
    #allocation6 [shape = 's32[1]{0}', space=sflag, size = 0x4, scoped, tag = 'scoped memory for _sae_forward.1']
    #allocation7 [shape = 'u8[8192]{0}', space=vmem, size = 0x2000, scoped, tag = 'output window, operand 1, single buffered']
    #allocation8 [shape = 's32[1]{0}', space=sflag, size = 0x4, scoped, tag = 'scoped memory for _sae_forward.1']
    %13 = vsyncpa [#allocation6], 0
    %14 = vsyncpa [#allocation8], 0
    // Predicated region
    $region2: #{_sae_forward.1} parent=1 // pred_check
      _
    $region3: #{_sae_forward.1} parent=1 // pred_check_branch
      %16 = sbr.rel (0) target = $region5
    $region4: #{_sae_forward.1} parent=1 // pred_region
      _
    $region5: #{_sae_forward.1} parent=1 // pred_fallthru
      _
    // Predicated region
    $region6: #{_sae_forward.1} parent=1 // pred_check
      _
    $region7: #{_sae_forward.1} parent=1 // pred_check_branch
      %18 = sbr.rel (0) target = $region9
    $region8: #{_sae_forward.1} parent=1 // pred_region
      _
    $region9: #{_sae_forward.1} parent=1 // pred_fallthru
      _
    // Predicated region
    $region10: #{_sae_forward.1} parent=1 // pred_check
      _
    $region11: #{_sae_forward.1} parent=1 // pred_check_branch
      %20 = sbr.rel (0) target = $region13
    $region12: #{_sae_forward.1} parent=1 // pred_region
      _
    $region13: #{_sae_forward.1} parent=1 // pred_fallthru
      _
    // Predicated region
    $region14: #{_sae_forward.1} parent=1 // pred_check
      _
    $region15: #{_sae_forward.1} parent=1 // pred_check_branch
      %22 = sbr.rel (0) target = $region17
    $region16: #{_sae_forward.1} parent=1 // pred_region
      _
    $region17: #{_sae_forward.1} parent=1 // pred_fallthru
      _
    // Predicated region
    $region18: #{_sae_forward.1} parent=1 // pred_check
      _
    $region19: #{_sae_forward.1} parent=1 // pred_check_branch
      %24 = sbr.rel (0) target = $region21
    $region20: #{_sae_forward.1} parent=1 // pred_region
      _
    $region21: #{_sae_forward.1} parent=1 // pred_fallthru
      _
    %p25 = scmp.eq.s32.totalorder 0, 0
    // Predicated region
    $region22: #{_sae_forward.1} parent=1 // pred_check
      %p26 = pneg %p25
    $region23: #{_sae_forward.1} parent=1 // pred_check_branch
      %28 = sbr.rel (%p26) target = $region25
    $region24: #{_sae_forward.1} parent=1 // pred_region
      %vm29 = vcmask 261120
      %30 = vst.msk [vmem:[#allocation2] sm:$0xff] %vm29, 0.0
      %31 = vst.msk [vmem:[#allocation2 + $0x8] sm:$0xff] %vm29, 0.0
      %32 = vst [vmem:[#allocation3] sm:$0x1] 0.0
      %33 = vst [vmem:[#allocation4] sm:$0x1] 0.0
    $region25: #{_sae_forward.1} parent=1 // pred_fallthru
      _
    %v34 = vld [vmem:[%s0] sm:$0xff]
    %v35 = vld [vmem:[%s0 + $0x8] sm:$0xff]
    %v36 = vld [vmem:[%s2] sm:$0x1]
    %v37 = vld [vmem:[%s1] sm:$0xff]
    %v38 = vld [vmem:[%s1 + $0x8] sm:$0xff]
    %v39 = vld [vmem:[%s1 + $0x10] sm:$0xff]
    %v40 = vld [vmem:[%s1 + $0x18] sm:$0xff]
    %v42 = vlaneseq
    %v43 = vshrl.u32 %v42, 7
    %v44 = vsub.s32 0, %v43
    %v45 = vrot.slane %v36, %v44
    %vm47 = vcmask 261120
    %v49 = vsel %vm47, %v34, 0
    %v52 = vsel %vm47, %v35, 0
    %54 = vmatprep.subr.mxu0 0.0
    %55 = vmatpush1.msra.mxu0 0.0
    %56 = vmatprep.subr.mxu0 0.0
    %57 = vmatpush1.msra.mxu0 0.0
    %58 = vmatprep.subr.mxu0 0.0
    %59 = vmatpush1.msra.mxu0 0.0
    %60 = vmatprep.subr.mxu0 0.0
    %61 = vmatpush1.msra.mxu0 0.0
    %62 = vmatprep.subr.mxu0 0.0
    %63 = vmatpush1.msra.mxu0 0.0
    %64 = vmatprep.subr.mxu0 0.0
    %65 = vmatpush1.msra.mxu0 0.0
    %66 = vmatprep.subr.mxu0 0.0
    %67 = vmatpush1.msra.mxu0 0.0
    %68 = vmatprep.subr.mxu0 0.0
    %69 = vmatpush1.msra.mxu0 0.0
    %70 = vmatprep.subr.mxu0 0.0
    %71 = vmatpush1.msra.mxu0 0.0
    %72 = vmatprep.subr.mxu0 0.0
    %73 = vmatpush1.msra.mxu0 0.0
    %74 = vmatprep.subr.mxu0 0.0
    %75 = vmatpush1.msra.mxu0 0.0
    %76 = vmatprep.subr.mxu0 0.0
    %77 = vmatpush1.msra.mxu0 0.0
    %78 = vmatprep.subr.mxu0 0.0
    %79 = vmatpush1.msra.mxu0 %v40
    %80 = vmatprep.subr.mxu0 0.0
    %81 = vmatpush1.msra.mxu0 %v39
    %82 = vmatprep.subr.mxu0 0.0
    %83 = vmatpush1.msra.mxu0 %v38
    %84 = vmatprep.subr.mxu0 0.0
    %85 = vmatpush1.msra.mxu0 %v37
    %86 = vmatprep.subr.mxu0 0.0
    %87 = vmatpush2.msra.mxu0 0.0
    %88 = vmatprep.subr.mxu0 0.0
    %89 = vmatpush2.msra.mxu0 0.0
    %90 = vmatprep.subr.mxu0 0.0
    %91 = vmatpush2.msra.mxu0 0.0
    %92 = vmatprep.subr.mxu0 0.0
    %93 = vmatpush2.msra.mxu0 0.0
    %94 = vmatprep.subr.mxu0 0.0
    %95 = vmatpush2.msra.mxu0 0.0
    %96 = vmatprep.subr.mxu0 0.0
    %97 = vmatpush2.msra.mxu0 0.0
    %98 = vmatprep.subr.mxu0 0.0
    %99 = vmatpush2.msra.mxu0 0.0
    %100 = vmatprep.subr.mxu0 0.0
    %101 = vmatpush2.msra.mxu0 0.0
    %102 = vmatprep.subr.mxu0 0.0
    %103 = vmatpush2.msra.mxu0 0.0
    %104 = vmatprep.subr.mxu0 0.0
    %105 = vmatpush2.msra.mxu0 0.0
    %106 = vmatprep.subr.mxu0 0.0
    %107 = vmatpush2.msra.mxu0 0.0
    %108 = vmatprep.subr.mxu0 0.0
    %109 = vmatpush2.msra.mxu0 0.0
    %110 = vmatprep.subr.mxu0 0.0
    %111 = vmatpush2.msra.mxu0 0.0
    %112 = vmatprep.subr.mxu0 0.0
    %113 = vmatpush2.msra.mxu0 0.0
    %114 = vmatprep.subr.mxu0 0.0
    %115 = vmatpush2.msra.mxu0 0.0
    %116 = vmatprep.subr.mxu0 0.0
    %117 = vmatpush2.msra.mxu0 0.0
    %118 = vmatprep.mubr.f32.mxu0 0.0
    %119 = vmatmul.mubr.f32.gmra.mxu0 %v49
    %v120 = vpop.f32.mrf.mxu0
    %v121 = vadd.f32 %v45, %v120
    %v122 = vpop.f32.mrf.mxu0
    %123 = vmatprep.mubr.f32.mxu0 0.0
    %124 = vmatmul.mubr.f32.gmra.mxu0 %v52
    %v125 = vpop.f32.mrf.mxu0
    %v126 = vadd.f32 %v45, %v125
    %v127 = vpop.f32.mrf.mxu0
    %128 = vdwg.mxu0
    %v129 = vmax.f32 %v121, 0.0
    %v130 = vmax.f32 %v126, 0.0
    %131 = vst [vmem:[#allocation5] sm:$0xff] %v129
    %132 = vst [vmem:[#allocation5 + $0x8] sm:$0xff] %v130
    %v133 = vld [vmem:[#allocation2] sm:$0xff]
    %v134 = vld [vmem:[#allocation2 + $0x8] sm:$0xff]
    %v135 = vld [vmem:[%s3] sm:$0xff]
    %v136 = vld [vmem:[%s3 + $0x8] sm:$0xff]
    %v137 = vld [vmem:[%s3 + $0x10] sm:$0xff]
    %v138 = vld [vmem:[%s3 + $0x18] sm:$0xff]
    %v139 = vld [vmem:[%s3 + $0x20] sm:$0xff]
    %v140 = vld [vmem:[%s3 + $0x28] sm:$0xff]
    %v141 = vld [vmem:[%s3 + $0x30] sm:$0xff]
    %v142 = vld [vmem:[%s3 + $0x38] sm:$0xff]
    %v143 = vld [vmem:[%s3 + $0x40] sm:$0xff]
    %v144 = vld [vmem:[%s3 + $0x48] sm:$0xff]
    %v145 = vld [vmem:[%s3 + $0x50] sm:$0xff]
    %v146 = vld [vmem:[%s3 + $0x58] sm:$0xff]
    %v147 = vld [vmem:[%s3 + $0x60] sm:$0xff]
    %v148 = vld [vmem:[%s3 + $0x68] sm:$0xff]
    %v149 = vld [vmem:[%s3 + $0x70] sm:$0xff]
    %v150 = vld [vmem:[%s3 + $0x78] sm:$0xff]
    %151 = vmatprep.subr.mxu0 0.0
    %152 = vmatpush1.msra.mxu0 %v150
    %153 = vmatprep.subr.mxu0 0.0
    %154 = vmatpush1.msra.mxu0 %v149
    %155 = vmatprep.subr.mxu0 0.0
    %156 = vmatpush1.msra.mxu0 %v148
    %157 = vmatprep.subr.mxu0 0.0
    %158 = vmatpush1.msra.mxu0 %v147
    %159 = vmatprep.subr.mxu0 0.0
    %160 = vmatpush1.msra.mxu0 %v146
    %161 = vmatprep.subr.mxu0 0.0
    %162 = vmatpush1.msra.mxu0 %v145
    %163 = vmatprep.subr.mxu0 0.0
    %164 = vmatpush1.msra.mxu0 %v144
    %165 = vmatprep.subr.mxu0 0.0
    %166 = vmatpush1.msra.mxu0 %v143
    %167 = vmatprep.subr.mxu0 0.0
    %168 = vmatpush1.msra.mxu0 %v142
    %169 = vmatprep.subr.mxu0 0.0
    %170 = vmatpush1.msra.mxu0 %v141
    %171 = vmatprep.subr.mxu0 0.0
    %172 = vmatpush1.msra.mxu0 %v140
    %173 = vmatprep.subr.mxu0 0.0
    %174 = vmatpush1.msra.mxu0 %v139
    %175 = vmatprep.subr.mxu0 0.0
    %176 = vmatpush1.msra.mxu0 %v138
    %177 = vmatprep.subr.mxu0 0.0
    %178 = vmatpush1.msra.mxu0 %v137
    %179 = vmatprep.subr.mxu0 0.0
    %180 = vmatpush1.msra.mxu0 %v136
    %181 = vmatprep.subr.mxu0 0.0
    %182 = vmatpush1.msra.mxu0 %v135
    %183 = vmatprep.subr.mxu0 0.0
    %184 = vmatpush2.msra.mxu0 0.0
    %185 = vmatprep.subr.mxu0 0.0
    %186 = vmatpush2.msra.mxu0 0.0
    %187 = vmatprep.subr.mxu0 0.0
    %188 = vmatpush2.msra.mxu0 0.0
    %189 = vmatprep.subr.mxu0 0.0
    %190 = vmatpush2.msra.mxu0 0.0
    %191 = vmatprep.subr.mxu0 0.0
    %192 = vmatpush2.msra.mxu0 0.0
    %193 = vmatprep.subr.mxu0 0.0
    %194 = vmatpush2.msra.mxu0 0.0
    %195 = vmatprep.subr.mxu0 0.0
    %196 = vmatpush2.msra.mxu0 0.0
    %197 = vmatprep.subr.mxu0 0.0
    %198 = vmatpush2.msra.mxu0 0.0
    %199 = vmatprep.subr.mxu0 0.0
    %200 = vmatpush2.msra.mxu0 0.0
    %201 = vmatprep.subr.mxu0 0.0
    %202 = vmatpush2.msra.mxu0 0.0
    %203 = vmatprep.subr.mxu0 0.0
    %204 = vmatpush2.msra.mxu0 0.0
    %205 = vmatprep.subr.mxu0 0.0
    %206 = vmatpush2.msra.mxu0 0.0
    %207 = vmatprep.subr.mxu0 0.0
    %208 = vmatpush2.msra.mxu0 0.0
    %209 = vmatprep.subr.mxu0 0.0
    %210 = vmatpush2.msra.mxu0 0.0
    %211 = vmatprep.subr.mxu0 0.0
    %212 = vmatpush2.msra.mxu0 0.0
    %213 = vmatprep.subr.mxu0 0.0
    %214 = vmatpush2.msra.mxu0 0.0
    %215 = vmatprep.mubr.f32.mxu0 0.0
    %216 = vmatmul.mubr.f32.gmra.mxu0 %v129
    %v217 = vpop.f32.mrf.mxu0
    %v218 = vadd.f32 0.0, %v217
    %v219 = vpop.f32.mrf.mxu0
    %220 = vmatprep.mubr.f32.mxu0 0.0
    %221 = vmatmul.mubr.f32.gmra.mxu0 %v130
    %v222 = vpop.f32.mrf.mxu0
    %v223 = vadd.f32 0.0, %v222
    %v224 = vpop.f32.mrf.mxu0
    %225 = vdwg.mxu0
    %v226 = vadd.f32 %v133, %v218
    %v227 = vadd.f32 %v134, %v223
    %228 = vst.msk [vmem:[#allocation2] sm:$0xff] %vm47, %v226
    %229 = vst.msk [vmem:[#allocation2 + $0x8] sm:$0xff] %vm47, %v227
    %v230 = vld [vmem:[#allocation3] sm:$0x1]
    %v231 = vadd.f32 %v129, %v130
    %v232 = vrot.slane %v231, 4
    %v233 = vadd.f32 %v231, %v232
    %v234 = vrot.slane %v233, 2
    %v235 = vadd.f32 %v233, %v234
    %v236 = vrot.slane %v235, 1
    %v237 = vadd.f32 %v235, %v236
    %v238 = vadd.f32 %v230, %v237
    %239 = vst [vmem:[#allocation3] sm:$0x1] %v238
    %v240 = vld [vmem:[#allocation4] sm:$0x1]
    %vm241 = vcmp.gt.f32.partialorder %v129, 0.0
    %vm242 = vcmp.gt.f32.partialorder %v130, 0.0
    %v243 = vsel %vm241, 1, 0
    %v244 = vsel %vm242, 1, 0
    %v245 = vcvt.s32.f32 %v243
    %v246 = vcvt.s32.f32 %v244
    %v247 = vadd.f32 %v245, %v246
    %v248 = vrot.slane %v247, 4
    %v249 = vadd.f32 %v247, %v248
    %v250 = vrot.slane %v249, 2
    %v251 = vadd.f32 %v249, %v250
    %v252 = vrot.slane %v251, 1
    %v253 = vadd.f32 %v251, %v252
    %v254 = vadd.f32 %v240, %v253
    %255 = vst [vmem:[#allocation4] sm:$0x1] %v254
    // Predicated region
    $region26: #{_sae_forward.1} parent=1 // pred_check
      %p256 = pneg %p25
    $region27: #{_sae_forward.1} parent=1 // pred_check_branch
      %258 = sbr.rel (%p256) target = $region29
    $region28: #{_sae_forward.1} parent=1 // pred_region
      %v259 = vld [vmem:[#allocation2] sm:$0xff]
      %v260 = vld [vmem:[#allocation2 + $0x8] sm:$0xff]
      %v261 = vld [vmem:[%s4] sm:$0x1]
      %v263 = vlaneseq
      %v264 = vshrl.u32 %v263, 7
      %v265 = vsub.s32 0, %v264
      %v266 = vrot.slane %v261, %v265
      %v268 = vadd.f32 %v259, %v266
      %v269 = vadd.f32 %v260, %v266
      %270 = vst.msk [vmem:[#allocation7] sm:$0xff] %vm47, %v268
      %271 = vst.msk [vmem:[#allocation7 + $0x8] sm:$0xff] %vm47, %v269
      %v272 = vsub.f32 %v34, %v268
      %v273 = vsub.f32 %v35, %v269
      %v274 = vmul.f32 %v272, %v272
      %v275 = vmul.f32 %v273, %v273
      %v276 = vsel %vm47, %v274, 0.0
      %v277 = vsel %vm47, %v275, 0.0
      %v278 = vadd.f32 %v276, %v277
      %279 = vadd.xlane.f32.xlu0 %v278
      %v280 = vpop.xlane.xlu0 %279
      %v281 = vrot.slane %v280, 4
      %v282 = vadd.f32 %v280, %v281
      %v283 = vrot.slane %v282, 2
      %v284 = vadd.f32 %v282, %v283
      %v285 = vrot.slane %v284, 1
      %v286 = vadd.f32 %v284, %v285
      %s287 = vtos %v286
      %v288 = vld [vmem:[#allocation3] sm:$0x1]
      %vm289 = vcmask 1040384
      %v290 = vsel %vm289, %v288, 0.0
      %291 = vadd.xlane.f32.xlu0 %v290
      %v292 = vpop.xlane.xlu0 %291
      %v293 = vrot.slane %v292, 4
      %v294 = vadd.f32 %v292, %v293
      %v295 = vrot.slane %v294, 2
      %v296 = vadd.f32 %v294, %v295
      %v297 = vrot.slane %v296, 1
      %v298 = vadd.f32 %v296, %v297
      %s299 = vtos %v298
      %v300 = vld [vmem:[#allocation4] sm:$0x1]
      %v301 = vsel %vm289, %v300, 0.0
      %302 = vadd.xlane.f32.xlu0 %v301
      %v303 = vpop.xlane.xlu0 %302
      %v304 = vrot.slane %v303, 4
      %v305 = vadd.f32 %v303, %v304
      %v306 = vrot.slane %v305, 2
      %v307 = vadd.f32 %v305, %v306
      %v308 = vrot.slane %v307, 1
      %v309 = vadd.f32 %v307, %v308
      %s310 = vtos %v309
      %v311 = vlaneseq
      %v312 = vshrl.u32 %v311, 7
      %v313 = vlaneseq
      %v314 = vand.u32 %v313, 127
      %vm315 = vcmp.eq.s32.totalorder %v312, 0
      %vm316 = vcmp.eq.s32.totalorder %v314, 0
      %vm317 = vmand %vm315, %vm316
      %v318 = vstv %s287
      %v319 = vsel %vm317, %v318, 0.0
      %vm320 = vcmp.eq.s32.totalorder %v314, 1
      %vm321 = vmand %vm315, %vm320
      %v322 = vstv %s299
      %v323 = vsel %vm321, %v322, 0.0
      %v324 = vadd.f32 %v319, %v323
      %vm325 = vcmp.eq.s32.totalorder %v314, 2
      %vm326 = vmand %vm315, %vm325
      %v327 = vstv %s310
      %v328 = vsel %vm326, %v327, 0.0
      %v329 = vadd.f32 %v324, %v328
      %330 = vst [vmem:[%s7] sm:$0xff] %v329
    $region29: #{_sae_forward.1} parent=1 // pred_fallthru
      _
    // Predicated region
    $region30: #{_sae_forward.1} parent=1 // pred_check
      _
    $region31: #{_sae_forward.1} parent=1 // pred_check_branch
      %332 = sbr.rel (0) target = $region33
    $region32: #{_sae_forward.1} parent=1 // pred_region
      %s334 = ssub.s32 256, 256
      %335 = vsyncadd [#allocation6], %s334
      %s336 = sshll.u32 [#allocation5], 4
      %s337 = int_to_ptr.vmem [resolvable:$true] %s336
      %342 = dma.vmem_to_hbm [thread:$0]  %s337, 256, %s5, [#allocation6], 128, 128, 8
    $region33: #{_sae_forward.1} parent=1 // pred_fallthru
      _
    // Predicated region
    $region34: #{_sae_forward.1} parent=1 // pred_check
      _
    $region35: #{_sae_forward.1} parent=1 // pred_check_branch
      %344 = sbr.rel (0) target = $region37
    $region36: #{_sae_forward.1} parent=1 // pred_region
      %s346 = ssub.s32 256, 256
      %347 = vsyncadd [#allocation8], %s346
      %s348 = sshll.u32 [#allocation7], 4
      %s349 = int_to_ptr.vmem [resolvable:$true] %s348
      %354 = dma.vmem_to_hbm [thread:$0]  %s349, 256, %s6, [#allocation8], 128, 128, 8
    $region37: #{_sae_forward.1} parent=1 // pred_fallthru
      _
    // Predicated region
    $region38: #{_sae_forward.1} parent=1 // pred_check
      _
    $region39: #{_sae_forward.1} parent=1 // pred_check_branch
      %356 = sbr.rel (0) target = $region41
    $region40: #{_sae_forward.1} parent=1 // pred_region
      _
    $region41: #{_sae_forward.1} parent=1 // pred_fallthru
      _
    // Predicated region
    $region42: #{_sae_forward.1} parent=1 // pred_check
      _
    $region43: #{_sae_forward.1} parent=1 // pred_check_branch
      %358 = sbr.rel (0) target = $region45
    $region44: #{_sae_forward.1} parent=1 // pred_region
      %359 = dma.done [#allocation6], 256
    $region45: #{_sae_forward.1} parent=1 // pred_fallthru
      _
    // Predicated region
    $region46: #{_sae_forward.1} parent=1 // pred_check
      _
    $region47: #{_sae_forward.1} parent=1 // pred_check_branch
      %361 = sbr.rel (0) target = $region49
    $region48: #{_sae_forward.1} parent=1 // pred_region
      %362 = dma.done [#allocation8], 256
    $region49: #{_sae_forward.1} parent=1 // pred_fallthru
      _
    // Predicated region
    $region50: #{_sae_forward.1} parent=1 // pred_check
      _
    $region51: #{_sae_forward.1} parent=1 // pred_check_branch
      %364 = sbr.rel (0) target = $region53
    $region52: #{_sae_forward.1} parent=1 // pred_region
      _
    $region53: #{_sae_forward.1} parent=1 // pred_fallthru
      _
    %365 = vsyncpa [#allocation6], 1
    %366 = vsyncpa [#allocation8], 1

</llo_original>
